<compile_context>
chip_gen: v6e
topology: v6e:2x2x1
jax: 0.10.0
libtpu: 0.0.40
codegen_flags: <defaults>
</compile_context>

<pallas_src>
import jax
import jax.numpy as jnp
from jax.experimental import pallas as pl
from jax.experimental.pallas import tpu as pltpu


# Sized for the smallest-VMEM part (v7x: 64 MiB per TensorCore, 32 MiB scoped default).
# Worst-case in-flight footprint ≈ 2x double-buffered bf16 chunk + ~2-3x chunk of f32
# temporaries + weights + accumulators ≈ 6-8x chunk + ~1 MiB ≈ 33 MiB < 40 MiB limit.
# v5e/v6e (128 MiB physical VMEM) could raise both, but at a 4 MiB chunk the per-step
# ~0.35 us overhead is already <15% of the chunk DMA time, so they stay near roofline.
_CHUNK_BUDGET_BYTES = 4 << 20
_VMEM_LIMIT_BYTES = 40 << 20


def _make_head_kernel(seq_len, ts):
    """Kernel closure. grid = (batch tiles, seq chunks); the seq axis streams the
    masked-mean pooling through f32 accumulators; the projection / LayerNorm / head
    runs only on the last seq step and writes the output once per batch tile."""

    def kernel(emb_ref, mask_ref,
               wnp_ref, bnp_ref,
               w1_ref, b1_ref, g_ref, beta_ref,
               w2_ref, b2_ref,
               out_ref,
               acc_emb, acc_msk):
        s = pl.program_id(1)

        @pl.when(s == 0)
        def _init():
            acc_emb[...] = jnp.zeros_like(acc_emb)
            acc_msk[...] = jnp.zeros_like(acc_msk)

        # ---- masked sum over this sequence chunk (matches encode_text pooling) ----
        emb = emb_ref[...].astype(jnp.float32)      # (tb, ts, H): f32 temps are chunk-sized
        msk = mask_ref[...].astype(jnp.float32)     # (tb, ts, 1): narrow dtype cast in-kernel

        if seq_len % ts != 0:                       # static: only emitted for ragged seq tails
            tok = s * ts + jax.lax.broadcasted_iota(jnp.int32, (1, ts, 1), 1)
            valid = tok < seq_len
            emb = jnp.where(valid, emb, 0.0)        # keep padded garbage out of valid rows
            msk = jnp.where(valid, msk, 0.0)

        acc_emb[...] += jnp.sum(emb * msk, axis=1)  # (tb, H)
        acc_msk[...] += jnp.sum(msk, axis=1)        # (tb, 1)

        # ---- projection + classifier head: only on the final sequence chunk ----
        @pl.when(s == pl.num_programs(1) - 1)
        def _finish():
            sum_mask = jnp.maximum(acc_msk[...], 1e-9)                     # .clamp(min=1e-9)
            sent = acc_emb[...] * pl.reciprocal(sum_mask, approx=False)    # mean pooling

            # node_projection: Linear(emb_dim, hidden_dim)
            nodes = jnp.dot(sent, wnp_ref[...],
                            preferred_element_type=jnp.float32) + bnp_ref[...]

            # TODO(synk): GraphTransformer (token-node attention + edge features) is an
            # external library module and is not re-implemented; the sentence node goes
            # straight to the classifier head.

            # classifier[0]: Linear(hidden, hidden)
            h = jnp.dot(nodes, w1_ref[...],
                        preferred_element_type=jnp.float32) + b1_ref[...]

            # classifier[1]: LayerNorm(hidden), eps = 1e-5 (PyTorch default)
            mean = jnp.mean(h, axis=-1, keepdims=True)
            var = jnp.mean(jnp.square(h - mean), axis=-1, keepdims=True)
            h = (h - mean) * jax.lax.rsqrt(var + 1e-5)
            h = h * g_ref[...] + beta_ref[...]

            # classifier[2]: ReLU ; classifier[3]: Dropout(0.1) == identity at inference
            h = jnp.maximum(h, 0.0)

            # classifier[4]: Linear(hidden, 1) — VPU multiply + lane reduction
            # (avoids an N=1 MXU matmul); stored once per batch tile.
            logits = jnp.sum(h * w2_ref[...], axis=-1, keepdims=True) + b2_ref[...]  # (tb, 1)
            out_ref[...] = logits[None].astype(out_ref.dtype)                        # (1, tb, 1)

    return kernel


def _pick_tiles(B, S, H, emb_itemsize, chunk_budget=_CHUNK_BUDGET_BYTES):
    """Pick (tb, ts) so one bf16 embedding chunk (tb, ts, H) stays <= chunk_budget;
    the budget already accounts for the f32 temporaries the kernel creates."""
    row = S * H * emb_itemsize                 # one batch row over the full sequence
    tb_rows = chunk_budget // max(1, row)      # rows per chunk at full sequence length
    if tb_rows >= min(B, 8):
        ts = S                                 # full sequence per step (common case)
        tb = min(B, tb_rows)
        if tb < B:
            tb = min(B, max(8, (tb // 8) * 8))         # sublane-friendly partial-batch tiles
        elif B >= 16:
            # guarantee >= 2 batch tiles so ("parallel", ...) can shard across both
            # v7x TensorCores (a harmless extra grid step on v5e/v6e)
            tb = max(8, -(-((B + 1) // 2) // 8) * 8)
    else:
        # very long sequences: small batch tile, chunk the sequence axis instead
        tb = min(B, 8)
        ts = (chunk_budget // max(1, tb * H * emb_itemsize) // 32) * 32
        ts = int(min(max(ts, 32), S))
    return int(tb), int(ts)


def sarcasm_detector_head(token_embeddings, attention_mask, params):
    """token_embeddings: (B, S, H) encoder last_hidden_state in its native dtype
    (bf16 halves the dominant HBM read); attention_mask: (B, S), any dtype.
    Returns (B,) float32 logits — the module's forward() output."""
    B, S, H = token_embeddings.shape
    wnp, bnp, w1, b1, gamma, beta, w2, b2 = params
    D = wnp.shape[1]
    assert wnp.shape == (H, D) and w1.shape == (D, D) and w2.shape == (D, 1)

    tb, ts = _pick_tiles(B, S, H, token_embeddings.dtype.itemsize)
    nb, ns = pl.cdiv(B, tb), pl.cdiv(S, ts)

    f32 = jnp.float32
    const2 = lambda b, s: (0, 0)
    mask3 = attention_mask.reshape(B, S, 1)     # narrow dtype kept; cast to f32 in-kernel

    out = pl.pallas_call(
        _make_head_kernel(S, ts),
        out_shape=jax.ShapeDtypeStruct((nb, tb, 1), f32),
        grid=(nb, ns),                                           # reduction (seq) axis last
        in_specs=[
            pl.BlockSpec((tb, ts, H), lambda b, s: (b, s, 0)),   # embeddings: streamed chunks
            pl.BlockSpec((tb, ts, 1), lambda b, s: (b, s, 0)),   # mask: streamed chunks
            pl.BlockSpec((H, D), const2),                        # weights: fetched once, resident
            pl.BlockSpec((1, D), const2),
            pl.BlockSpec((D, D), const2),
            pl.BlockSpec((1, D), const2),
            pl.BlockSpec((1, D), const2),
            pl.BlockSpec((1, D), const2),
            pl.BlockSpec((1, D), const2),
            pl.BlockSpec((1, 1), const2),
        ],
        # output block index depends only on the batch tile -> written back once per tile
        out_specs=pl.BlockSpec((1, tb, 1), lambda b, s: (b, 0, 0)),
        scratch_shapes=[
            pltpu.VMEM((tb, H), f32),    # running masked sum of embeddings
            pltpu.VMEM((tb, 1), f32),    # running sum of the mask
        ],
        compiler_params=pltpu.CompilerParams(
            dimension_semantics=("parallel", "arbitrary"),       # batch tiles across TCs (v7x)
            vmem_limit_bytes=_VMEM_LIMIT_BYTES,
        ),
    )(
        token_embeddings,                      # native dtype — no wrapper-side f32 upcast
        mask3,
        wnp.astype(f32),
        bnp.reshape(1, D).astype(f32),
        w1.astype(f32),
        b1.reshape(1, D).astype(f32),
        gamma.reshape(1, D).astype(f32),
        beta.reshape(1, D).astype(f32),
        w2.reshape(1, D).astype(f32),          # (D,1) -> row vector for the lane reduction
        b2.reshape(1, 1).astype(f32),
    )
    # (nb, tb, 1) -> flatten, drop batch-padding rows, .squeeze(-1) -> (B,)
    # NOTE: padded rows of a partial last batch tile may carry garbage (discarded here).
    return out.reshape(-1)[:B]


def init_params(key, emb_dim, hidden_dim):
    """Deterministic synthetic init for node_projection + classifier head."""
    k0, k1, k2, k3 = jax.random.split(key, 4)
    s_np = emb_dim ** -0.5
    s_1 = hidden_dim ** -0.5
    wnp = jax.random.uniform(k0, (emb_dim, hidden_dim), jnp.float32, -s_np, s_np)
    bnp = jax.random.uniform(k1, (hidden_dim,), jnp.float32, -s_np, s_np)
    w1 = jax.random.uniform(k2, (hidden_dim, hidden_dim), jnp.float32, -s_1, s_1)
    b1 = jnp.zeros((hidden_dim,), jnp.float32)
    gamma = jnp.ones((hidden_dim,), jnp.float32)
    beta = jnp.zeros((hidden_dim,), jnp.float32)
    w2 = jax.random.uniform(k3, (hidden_dim, 1), jnp.float32, -s_1, s_1)
    b2 = jnp.zeros((1,), jnp.float32)
    return (wnp, bnp, w1, b1, gamma, beta, w2, b2)


def _reference(token_embeddings, attention_mask, params):
    """Pure-JAX reference mirroring the PyTorch forward (eval mode)."""
    wnp, bnp, w1, b1, gamma, beta, w2, b2 = params
    emb = token_embeddings.astype(jnp.float32)
    mask = attention_mask.astype(jnp.float32)[:, :, None]
    sum_emb = jnp.sum(emb * mask, axis=1)
    sum_mask = jnp.maximum(jnp.sum(mask, axis=1), 1e-9)
    sent = sum_emb / sum_mask
    nodes = sent @ wnp + bnp
    h = nodes @ w1 + b1
    mean = jnp.mean(h, axis=-1, keepdims=True)
    var = jnp.mean((h - mean) ** 2, axis=-1, keepdims=True)
    h = (h - mean) / jnp.sqrt(var + 1e-5) * gamma + beta
    h = jnp.maximum(h, 0.0)
    return (h @ w2 + b2)[:, 0]


if __name__ == "__main__":
    key = jax.random.PRNGKey(0)
    k_emb, k_params = jax.random.split(key)

    # small shapes: batch=2, seq=8, encoder hidden stand-in=32, hidden_dim=128 (module default)
    B, S, H, D = 2, 8, 32, 128
    # encoder output in its native bf16 (no wrapper upcast -> half the HBM read)
    token_embeddings = jax.random.normal(k_emb, (B, S, H), jnp.float32).astype(jnp.bfloat16)
    # attention_mask with trailing padding (like tokenizer padding=True), narrow dtype
    seq_lens = jnp.array([8, 5], dtype=jnp.int32)
    attention_mask = (jnp.arange(S)[None, :] < seq_lens[:, None]).astype(jnp.bfloat16)

    params = init_params(k_params, H, D)

    logits = sarcasm_detector_head(token_embeddings, attention_mask, params)
    jax.block_until_ready(logits)

    ref = _reference(token_embeddings, attention_mask, params)
    assert logits.shape == (B,)
    assert jnp.allclose(logits, ref, atol=1e-3, rtol=1e-3), (logits, ref)

    print("KERNEL_OK")
</pallas_src>

<mosaic_0001>
module attributes {stable_mosaic.version = 11 : i64} {
  func.func @kernel(%arg0: i32, %arg1: i32, %arg2: memref<2x8x32xbf16, #tpu.memory_space<vmem>>, %arg3: memref<2x8x1xbf16, #tpu.memory_space<vmem>>, %arg4: memref<32x128xf32, #tpu.memory_space<vmem>>, %arg5: memref<1x128xf32, #tpu.memory_space<vmem>>, %arg6: memref<128x128xf32, #tpu.memory_space<vmem>>, %arg7: memref<1x128xf32, #tpu.memory_space<vmem>>, %arg8: memref<1x128xf32, #tpu.memory_space<vmem>>, %arg9: memref<1x128xf32, #tpu.memory_space<vmem>>, %arg10: memref<1x128xf32, #tpu.memory_space<vmem>>, %arg11: memref<1x1xf32, #tpu.memory_space<vmem>>, %arg12: memref<1x2x1xf32, #tpu.memory_space<vmem>>, %arg13: memref<2x32xf32, #tpu.memory_space<vmem>>, %arg14: memref<2x1xf32, #tpu.memory_space<vmem>>) attributes {dimension_semantics = [#tpu.dimension_semantics<parallel>, #tpu.dimension_semantics<arbitrary>], iteration_bounds = array<i64: 1, 1>, scalar_prefetch = 0 : i64, scratch_operands = 2 : i64, tpu.core_type = #tpu.core_type<tc>, window_params = [{transform_indices = @transform_0, window_bounds = array<i64: 2, 8, 32>}, {transform_indices = @transform_1, window_bounds = array<i64: 2, 8, 1>}, {pipeline_mode = #tpu.pipeline_mode<synchronous>, transform_indices = @transform_2, window_bounds = array<i64: 32, 128>}, {pipeline_mode = #tpu.pipeline_mode<synchronous>, transform_indices = @transform_3, window_bounds = array<i64: 1, 128>}, {pipeline_mode = #tpu.pipeline_mode<synchronous>, transform_indices = @transform_4, window_bounds = array<i64: 128, 128>}, {pipeline_mode = #tpu.pipeline_mode<synchronous>, transform_indices = @transform_5, window_bounds = array<i64: 1, 128>}, {pipeline_mode = #tpu.pipeline_mode<synchronous>, transform_indices = @transform_6, window_bounds = array<i64: 1, 128>}, {pipeline_mode = #tpu.pipeline_mode<synchronous>, transform_indices = @transform_7, window_bounds = array<i64: 1, 128>}, {pipeline_mode = #tpu.pipeline_mode<synchronous>, transform_indices = @transform_8, window_bounds = array<i64: 1, 128>}, {pipeline_mode = #tpu.pipeline_mode<synchronous>, transform_indices = @transform_9, window_bounds = array<i64: 1, 1>}, {transform_indices = @transform_10, window_bounds = array<i64: 1, 2, 1>}]} {
    %c0_i32 = arith.constant 0 : i32
    %0 = arith.cmpi eq, %arg1, %c0_i32 : i32
    %1 = arith.extui %0 : i1 to i32
    %c0_i32_0 = arith.constant 0 : i32
    %2 = arith.cmpi ne, %1, %c0_i32_0 : i32
    scf.if %2 {
      %cst_17 = arith.constant 0.000000e+00 : f32
      %20 = vector.broadcast %cst_17 : f32 to vector<2x32xf32>
      %c0_18 = arith.constant 0 : index
      %c0_19 = arith.constant 0 : index
      %21 = vector.load %arg13[%c0_18, %c0_19] : memref<2x32xf32, #tpu.memory_space<vmem>>, vector<2x32xf32>
      tpu.vector_store %arg13[%c0_18, %c0_19], %20 {strides = array<i32>} : memref<2x32xf32, #tpu.memory_space<vmem>>, vector<2x32xf32>,
      %cst_20 = arith.constant 0.000000e+00 : f32
      %22 = vector.broadcast %cst_20 : f32 to vector<2x1xf32>
      %c0_21 = arith.constant 0 : index
      %c0_22 = arith.constant 0 : index
      %23 = vector.load %arg14[%c0_21, %c0_22] : memref<2x1xf32, #tpu.memory_space<vmem>>, vector<2x1xf32>
      tpu.vector_store %arg14[%c0_21, %c0_22], %22 {strides = array<i32>} : memref<2x1xf32, #tpu.memory_space<vmem>>, vector<2x1xf32>,
    } else {
    }
    %c0 = arith.constant 0 : index
    %c0_1 = arith.constant 0 : index
    %c0_2 = arith.constant 0 : index
    %3 = vector.load %arg2[%c0, %c0_1, %c0_2] : memref<2x8x32xbf16, #tpu.memory_space<vmem>>, vector<2x8x32xbf16>
    %4 = arith.extf %3 : vector<2x8x32xbf16> to vector<2x8x32xf32>
    %c0_3 = arith.constant 0 : index
    %c0_4 = arith.constant 0 : index
    %c0_5 = arith.constant 0 : index
    %5 = vector.load %arg3[%c0_3, %c0_4, %c0_5] : memref<2x8x1xbf16, #tpu.memory_space<vmem>>, vector<2x8x1xbf16>
    %6 = arith.extf %5 : vector<2x8x1xbf16> to vector<2x8x1xf32>
    %c0_6 = arith.constant 0 : index
    %c0_7 = arith.constant 0 : index
    %7 = vector.load %arg13[%c0_6, %c0_7] : memref<2x32xf32, #tpu.memory_space<vmem>>, vector<2x32xf32>
    %8 = vector.broadcast %6 : vector<2x8x1xf32> to vector<2x8x32xf32>
    %9 = arith.mulf %4, %8 : vector<2x8x32xf32>
    %cst = arith.constant dense<0.000000e+00> : vector<2x32xf32>
    %10 = vector.multi_reduction <add>, %9, %cst [1] : vector<2x8x32xf32> to vector<2x32xf32>
    %11 = arith.addf %7, %10 : vector<2x32xf32>
    %c0_8 = arith.constant 0 : index
    %c0_9 = arith.constant 0 : index
    %12 = vector.load %arg13[%c0_8, %c0_9] : memref<2x32xf32, #tpu.memory_space<vmem>>, vector<2x32xf32>
    tpu.vector_store %arg13[%c0_8, %c0_9], %11 {strides = array<i32>} : memref<2x32xf32, #tpu.memory_space<vmem>>, vector<2x32xf32>,
    %c0_10 = arith.constant 0 : index
    %c0_11 = arith.constant 0 : index
    %13 = vector.load %arg14[%c0_10, %c0_11] : memref<2x1xf32, #tpu.memory_space<vmem>>, vector<2x1xf32>
    %cst_12 = arith.constant dense<0.000000e+00> : vector<2x1xf32>
    %14 = vector.multi_reduction <add>, %6, %cst_12 [1] : vector<2x8x1xf32> to vector<2x1xf32>
    %15 = arith.addf %13, %14 : vector<2x1xf32>
    %c0_13 = arith.constant 0 : index
    %c0_14 = arith.constant 0 : index
    %16 = vector.load %arg14[%c0_13, %c0_14] : memref<2x1xf32, #tpu.memory_space<vmem>>, vector<2x1xf32>
    tpu.vector_store %arg14[%c0_13, %c0_14], %15 {strides = array<i32>} : memref<2x1xf32, #tpu.memory_space<vmem>>, vector<2x1xf32>,
    %c0_i32_15 = arith.constant 0 : i32
    %17 = arith.cmpi eq, %arg1, %c0_i32_15 : i32
    %18 = arith.extui %17 : i1 to i32
    %c0_i32_16 = arith.constant 0 : i32
    %19 = arith.cmpi ne, %18, %c0_i32_16 : i32
    scf.if %19 {
      %c0_17 = arith.constant 0 : index
      %c0_18 = arith.constant 0 : index
      %20 = vector.load %arg14[%c0_17, %c0_18] : memref<2x1xf32, #tpu.memory_space<vmem>>, vector<2x1xf32>
      %cst_19 = arith.constant 9.99999971E-10 : f32
      %21 = vector.broadcast %cst_19 : f32 to vector<2x1xf32>
      %22 = arith.maximumf %20, %21 : vector<2x1xf32>
      %c0_20 = arith.constant 0 : index
      %c0_21 = arith.constant 0 : index
      %23 = vector.load %arg13[%c0_20, %c0_21] : memref<2x32xf32, #tpu.memory_space<vmem>>, vector<2x32xf32>
      %24 = tpu.reciprocal %22 : vector<2x1xf32> -> vector<2x1xf32>
      %25 = vector.broadcast %24 : vector<2x1xf32> to vector<2x32xf32>
      %26 = arith.mulf %23, %25 : vector<2x32xf32>
      %c0_22 = arith.constant 0 : index
      %c0_23 = arith.constant 0 : index
      %27 = vector.load %arg4[%c0_22, %c0_23] : memref<32x128xf32, #tpu.memory_space<vmem>>, vector<32x128xf32>
      %cst_24 = arith.constant dense<0.000000e+00> : vector<2x128xf32>
      %28 = tpu.matmul %26, %27, %cst_24 {dimension_numbers = #tpu.dot_dimension_numbers<[1], [0], [0], [1], [0, 0, 1, 1], [], []>} : vector<2x32xf32>, vector<32x128xf32>, vector<2x128xf32> -> vector<2x128xf32>
      %c0_25 = arith.constant 0 : index
      %c0_26 = arith.constant 0 : index
      %29 = vector.load %arg5[%c0_25, %c0_26] : memref<1x128xf32, #tpu.memory_space<vmem>>, vector<1x128xf32>
      %30 = vector.broadcast %29 : vector<1x128xf32> to vector<2x128xf32>
      %31 = arith.addf %28, %30 : vector<2x128xf32>
      %c0_27 = arith.constant 0 : index
      %c0_28 = arith.constant 0 : index
      %32 = vector.load %arg6[%c0_27, %c0_28] : memref<128x128xf32, #tpu.memory_space<vmem>>, vector<128x128xf32>
      %cst_29 = arith.constant dense<0.000000e+00> : vector<2x128xf32>
      %33 = tpu.matmul %31, %32, %cst_29 {dimension_numbers = #tpu.dot_dimension_numbers<[1], [0], [0], [1], [0, 0, 1, 1], [], []>} : vector<2x128xf32>, vector<128x128xf32>, vector<2x128xf32> -> vector<2x128xf32>
      %c0_30 = arith.constant 0 : index
      %c0_31 = arith.constant 0 : index
      %34 = vector.load %arg7[%c0_30, %c0_31] : memref<1x128xf32, #tpu.memory_space<vmem>>, vector<1x128xf32>
      %35 = vector.broadcast %34 : vector<1x128xf32> to vector<2x128xf32>
      %36 = arith.addf %33, %35 : vector<2x128xf32>
      %cst_32 = arith.constant dense<0.000000e+00> : vector<2xf32>
      %37 = vector.multi_reduction <add>, %36, %cst_32 [1] : vector<2x128xf32> to vector<2xf32>
      %38 = vector.shape_cast %37 : vector<2xf32> to vector<2x1xf32>
      %cst_33 = arith.constant 1.280000e+02 : f32
      %39 = vector.broadcast %cst_33 : f32 to vector<2x1xf32>
      %40 = arith.divf %38, %39 : vector<2x1xf32>
      %41 = vector.broadcast %40 : vector<2x1xf32> to vector<2x128xf32>
      %42 = arith.subf %36, %41 : vector<2x128xf32>
      %43 = arith.mulf %42, %42 : vector<2x128xf32>
      %cst_34 = arith.constant dense<0.000000e+00> : vector<2xf32>
      %44 = vector.multi_reduction <add>, %43, %cst_34 [1] : vector<2x128xf32> to vector<2xf32>
      %45 = vector.shape_cast %44 : vector<2xf32> to vector<2x1xf32>
      %cst_35 = arith.constant 1.280000e+02 : f32
      %46 = vector.broadcast %cst_35 : f32 to vector<2x1xf32>
      %47 = arith.divf %45, %46 : vector<2x1xf32>
      %48 = vector.broadcast %40 : vector<2x1xf32> to vector<2x128xf32>
      %49 = arith.subf %36, %48 : vector<2x128xf32>
      %cst_36 = arith.constant 9.99999974E-6 : f32
      %50 = vector.broadcast %cst_36 : f32 to vector<2x1xf32>
      %51 = arith.addf %47, %50 : vector<2x1xf32>
      %52 = math.rsqrt %51 : vector<2x1xf32>
      %53 = vector.broadcast %52 : vector<2x1xf32> to vector<2x128xf32>
      %54 = arith.mulf %49, %53 : vector<2x128xf32>
      %c0_37 = arith.constant 0 : index
      %c0_38 = arith.constant 0 : index
      %55 = vector.load %arg8[%c0_37, %c0_38] : memref<1x128xf32, #tpu.memory_space<vmem>>, vector<1x128xf32>
      %56 = vector.broadcast %55 : vector<1x128xf32> to vector<2x128xf32>
      %57 = arith.mulf %54, %56 : vector<2x128xf32>
      %c0_39 = arith.constant 0 : index
      %c0_40 = arith.constant 0 : index
      %58 = vector.load %arg9[%c0_39, %c0_40] : memref<1x128xf32, #tpu.memory_space<vmem>>, vector<1x128xf32>
      %59 = vector.broadcast %58 : vector<1x128xf32> to vector<2x128xf32>
      %60 = arith.addf %57, %59 : vector<2x128xf32>
      %cst_41 = arith.constant 0.000000e+00 : f32
      %61 = vector.broadcast %cst_41 : f32 to vector<2x128xf32>
      %62 = arith.maximumf %60, %61 : vector<2x128xf32>
      %c0_42 = arith.constant 0 : index
      %c0_43 = arith.constant 0 : index
      %63 = vector.load %arg10[%c0_42, %c0_43] : memref<1x128xf32, #tpu.memory_space<vmem>>, vector<1x128xf32>
      %64 = vector.broadcast %63 : vector<1x128xf32> to vector<2x128xf32>
      %65 = arith.mulf %62, %64 : vector<2x128xf32>
      %cst_44 = arith.constant dense<0.000000e+00> : vector<2xf32>
      %66 = vector.multi_reduction <add>, %65, %cst_44 [1] : vector<2x128xf32> to vector<2xf32>
      %67 = vector.shape_cast %66 : vector<2xf32> to vector<2x1xf32>
      %c0_45 = arith.constant 0 : index
      %c0_46 = arith.constant 0 : index
      %68 = vector.load %arg11[%c0_45, %c0_46] : memref<1x1xf32, #tpu.memory_space<vmem>>, vector<1x1xf32>
      %69 = vector.broadcast %68 : vector<1x1xf32> to vector<2x1xf32>
      %70 = arith.addf %67, %69 : vector<2x1xf32>
      %71 = vector.shape_cast %70 : vector<2x1xf32> to vector<1x2x1xf32>
      %c0_47 = arith.constant 0 : index
      %c0_48 = arith.constant 0 : index
      %c0_49 = arith.constant 0 : index
      %72 = vector.load %arg12[%c0_47, %c0_48, %c0_49] : memref<1x2x1xf32, #tpu.memory_space<vmem>>, vector<1x2x1xf32>
      tpu.vector_store %arg12[%c0_47, %c0_48, %c0_49], %71 {strides = array<i32>} : memref<1x2x1xf32, #tpu.memory_space<vmem>>, vector<1x2x1xf32>,
    } else {
    }
    return
  }
  func.func @transform_0(%arg0: i32, %arg1: i32) -> (i32, i32, i32) {
    %c0_i32 = arith.constant 0 : i32
    %c0_i32_0 = arith.constant 0 : i32
    return %arg0, %arg1, %c0_i32 : i32, i32, i32
  }
  func.func @transform_1(%arg0: i32, %arg1: i32) -> (i32, i32, i32) {
    %c0_i32 = arith.constant 0 : i32
    %c0_i32_0 = arith.constant 0 : i32
    return %arg0, %arg1, %c0_i32 : i32, i32, i32
  }
  func.func @transform_2(%arg0: i32, %arg1: i32) -> (i32, i32) {
    %c0_i32 = arith.constant 0 : i32
    %c0_i32_0 = arith.constant 0 : i32
    %c0_i32_1 = arith.constant 0 : i32
    return %c0_i32, %c0_i32_0 : i32, i32
  }
  func.func @transform_3(%arg0: i32, %arg1: i32) -> (i32, i32) {
    %c0_i32 = arith.constant 0 : i32
    %c0_i32_0 = arith.constant 0 : i32
    %c0_i32_1 = arith.constant 0 : i32
    return %c0_i32, %c0_i32_0 : i32, i32
  }
  func.func @transform_4(%arg0: i32, %arg1: i32) -> (i32, i32) {
    %c0_i32 = arith.constant 0 : i32
    %c0_i32_0 = arith.constant 0 : i32
    %c0_i32_1 = arith.constant 0 : i32
    return %c0_i32, %c0_i32_0 : i32, i32
  }
  func.func @transform_5(%arg0: i32, %arg1: i32) -> (i32, i32) {
    %c0_i32 = arith.constant 0 : i32
    %c0_i32_0 = arith.constant 0 : i32
    %c0_i32_1 = arith.constant 0 : i32
    return %c0_i32, %c0_i32_0 : i32, i32
  }
  func.func @transform_6(%arg0: i32, %arg1: i32) -> (i32, i32) {
    %c0_i32 = arith.constant 0 : i32
    %c0_i32_0 = arith.constant 0 : i32
    %c0_i32_1 = arith.constant 0 : i32
    return %c0_i32, %c0_i32_0 : i32, i32
  }
  func.func @transform_7(%arg0: i32, %arg1: i32) -> (i32, i32) {
    %c0_i32 = arith.constant 0 : i32
    %c0_i32_0 = arith.constant 0 : i32
    %c0_i32_1 = arith.constant 0 : i32
    return %c0_i32, %c0_i32_0 : i32, i32
  }
  func.func @transform_8(%arg0: i32, %arg1: i32) -> (i32, i32) {
    %c0_i32 = arith.constant 0 : i32
    %c0_i32_0 = arith.constant 0 : i32
    %c0_i32_1 = arith.constant 0 : i32
    return %c0_i32, %c0_i32_0 : i32, i32
  }
  func.func @transform_9(%arg0: i32, %arg1: i32) -> (i32, i32) {
    %c0_i32 = arith.constant 0 : i32
    %c0_i32_0 = arith.constant 0 : i32
    %c0_i32_1 = arith.constant 0 : i32
    return %c0_i32, %c0_i32_0 : i32, i32
  }
  func.func @transform_10(%arg0: i32, %arg1: i32) -> (i32, i32, i32) {
    %c0_i32 = arith.constant 0 : i32
    %c0_i32_0 = arith.constant 0 : i32
    %c0_i32_1 = arith.constant 0 : i32
    return %arg0, %c0_i32, %c0_i32_0 : i32, i32, i32
  }
}

</mosaic_0001>

<llo_original>
// kernel: tpu_custom_call.1
$region0: #{tpu_custom_call.1}
  #allocation0 [shape = 'u32[]', space=smem, size = 0x4, offset = 0x4, fixed_abs, tag = 'smem constant byte address 0x4 - core index']
  #allocation1 [shape = 'u32[144,128]{1,0:T(1,128)}', space=vmem, size = 0x12000, scoped, tag = 'internal scratch']
  #allocation2 [shape = 'f32[2,32]{1,0:T(2,128)}', space=vmem, size = 0x400, scoped, tag = 'scratch operand']
  #allocation3 [shape = 'f32[2,1]{1,0:T(2,128)}', space=vmem, size = 0x400, scoped, tag = 'scratch operand']
  #allocation4 [shape = 'f32[1,1]{1,0:T(1,128)S(1)}', space=vmem, size = 0x200, scoped, tag = 'scoped memory for tpu_custom_call.1']
  %s0 = inlined_call_operand.vmem [shape: bf16[2,8,32], index: 0, kind: input, shape index: {}]
  %s1 = inlined_call_operand.vmem [shape: bf16[2,8,1], index: 1, kind: input, shape index: {}]
  %s2 = inlined_call_operand.hbm [shape: f32[32,128], index: 2, kind: input, shape index: {}]
  %s3 = inlined_call_operand.vmem [shape: f32[1,128], index: 3, kind: input, shape index: {}]
  %s4 = inlined_call_operand.hbm [shape: f32[128,128], index: 4, kind: input, shape index: {}]
  %s5 = inlined_call_operand.vmem [shape: f32[1,128], index: 5, kind: input, shape index: {}]
  %s6 = inlined_call_operand.vmem [shape: f32[1,128], index: 6, kind: input, shape index: {}]
  %s7 = inlined_call_operand.vmem [shape: f32[1,128], index: 7, kind: input, shape index: {}]
  %s8 = inlined_call_operand.vmem [shape: f32[1,128], index: 8, kind: input, shape index: {}]
  %s9 = inlined_call_operand.<no memory space> [shape: f32[1,1], index: 9, kind: input, shape index: {}]
  %s10 = inlined_call_operand.vmem [shape: f32[1,2,1], index: 10, kind: output, shape index: {}]
  %s11 = sld [smem:[#allocation0]]
  $region66: #{tpu_custom_call.1} parent=0
    _
  %s13 = ssub.s32 1, %s11
  %s14 = scalar_select 0, %s13, %s11
  %v15 = vstv %s9
  %16 = vst [vmem:[#allocation4] sm:$0x1] %v15
  $region1: #{tpu_custom_call.1} parent=0
    #allocation5 [shape = 'u8[16384]{0}', space=vmem, size = 0x4000, scoped, tag = 'input window, operand 2, single buffered']
    #allocation6 [shape = 's32[1]{0}', space=sflag, size = 0x4, scoped, tag = 'scoped memory for tpu_custom_call.1']
    #allocation7 [shape = 'u8[65536]{0}', space=vmem, size = 0x10000, scoped, tag = 'input window, operand 4, single buffered']
    #allocation8 [shape = 's32[1]{0}', space=sflag, size = 0x4, scoped, tag = 'scoped memory for tpu_custom_call.1']
    %17 = vsyncpa [#allocation6], 0
    %18 = vsyncpa [#allocation8], 0
    // Predicated region
    $region2: #{tpu_custom_call.1} parent=1 // pred_check
      _
    $region3: #{tpu_custom_call.1} parent=1 // pred_check_branch
      %20 = sbr.rel (0) target = $region5
    $region4: #{tpu_custom_call.1} parent=1 // pred_region
      _
    $region5: #{tpu_custom_call.1} parent=1 // pred_fallthru
      _
    // Predicated region
    $region6: #{tpu_custom_call.1} parent=1 // pred_check
      _
    $region7: #{tpu_custom_call.1} parent=1 // pred_check_branch
      %22 = sbr.rel (0) target = $region9
    $region8: #{tpu_custom_call.1} parent=1 // pred_region
      _
    $region9: #{tpu_custom_call.1} parent=1 // pred_fallthru
      _
    // Predicated region
    $region10: #{tpu_custom_call.1} parent=1 // pred_check
      _
    $region11: #{tpu_custom_call.1} parent=1 // pred_check_branch
      %24 = sbr.rel (0) target = $region13
    $region12: #{tpu_custom_call.1} parent=1 // pred_region
      %s26 = ssub.s32 512, 512
      %27 = vsyncadd [#allocation6], %s26
      %s28 = sshll.u32 [#allocation5], 4
      %s29 = int_to_ptr.vmem [resolvable:$true] %s28
      %34 = dma.hbm_to_vmem [thread:$0]  %s2, 512, %s29, [#allocation6], 128, 128, 8
    $region13: #{tpu_custom_call.1} parent=1 // pred_fallthru
      _
    // Predicated region
    $region14: #{tpu_custom_call.1} parent=1 // pred_check
      _
    $region15: #{tpu_custom_call.1} parent=1 // pred_check_branch
      %36 = sbr.rel (0) target = $region17
    $region16: #{tpu_custom_call.1} parent=1 // pred_region
      _
    $region17: #{tpu_custom_call.1} parent=1 // pred_fallthru
      _
    // Predicated region
    $region18: #{tpu_custom_call.1} parent=1 // pred_check
      _
    $region19: #{tpu_custom_call.1} parent=1 // pred_check_branch
      %38 = sbr.rel (0) target = $region21
    $region20: #{tpu_custom_call.1} parent=1 // pred_region
      %s40 = ssub.s32 2048, 2048
      %41 = vsyncadd [#allocation8], %s40
      %s42 = sshll.u32 [#allocation7], 4
      %s43 = int_to_ptr.vmem [resolvable:$true] %s42
      %48 = dma.hbm_to_vmem [thread:$0]  %s4, 2048, %s43, [#allocation8], 128, 128, 8
    $region21: #{tpu_custom_call.1} parent=1 // pred_fallthru
      _
    // Predicated region
    $region22: #{tpu_custom_call.1} parent=1 // pred_check
      _
    $region23: #{tpu_custom_call.1} parent=1 // pred_check_branch
      %50 = sbr.rel (0) target = $region25
    $region24: #{tpu_custom_call.1} parent=1 // pred_region
      _
    $region25: #{tpu_custom_call.1} parent=1 // pred_fallthru
      _
    // Predicated region
    $region26: #{tpu_custom_call.1} parent=1 // pred_check
      _
    $region27: #{tpu_custom_call.1} parent=1 // pred_check_branch
      %52 = sbr.rel (0) target = $region29
    $region28: #{tpu_custom_call.1} parent=1 // pred_region
      _
    $region29: #{tpu_custom_call.1} parent=1 // pred_fallthru
      _
    // Predicated region
    $region30: #{tpu_custom_call.1} parent=1 // pred_check
      _
    $region31: #{tpu_custom_call.1} parent=1 // pred_check_branch
      %54 = sbr.rel (0) target = $region33
    $region32: #{tpu_custom_call.1} parent=1 // pred_region
      _
    $region33: #{tpu_custom_call.1} parent=1 // pred_fallthru
      _
    // Predicated region
    $region34: #{tpu_custom_call.1} parent=1 // pred_check
      _
    $region35: #{tpu_custom_call.1} parent=1 // pred_check_branch
      %56 = sbr.rel (0) target = $region37
    $region36: #{tpu_custom_call.1} parent=1 // pred_region
      _
    $region37: #{tpu_custom_call.1} parent=1 // pred_fallthru
      _
    // Predicated region
    $region38: #{tpu_custom_call.1} parent=1 // pred_check
      _
    $region39: #{tpu_custom_call.1} parent=1 // pred_check_branch
      %58 = sbr.rel (0) target = $region41
    $region40: #{tpu_custom_call.1} parent=1 // pred_region
      _
    $region41: #{tpu_custom_call.1} parent=1 // pred_fallthru
      _
    // Predicated region
    $region42: #{tpu_custom_call.1} parent=1 // pred_check
      _
    $region43: #{tpu_custom_call.1} parent=1 // pred_check_branch
      %60 = sbr.rel (0) target = $region45
    $region44: #{tpu_custom_call.1} parent=1 // pred_region
      %61 = dma.done [#allocation6], 512
    $region45: #{tpu_custom_call.1} parent=1 // pred_fallthru
      _
    // Predicated region
    $region46: #{tpu_custom_call.1} parent=1 // pred_check
      _
    $region47: #{tpu_custom_call.1} parent=1 // pred_check_branch
      %63 = sbr.rel (0) target = $region49
    $region48: #{tpu_custom_call.1} parent=1 // pred_region
      %64 = dma.done [#allocation8], 2048
    $region49: #{tpu_custom_call.1} parent=1 // pred_fallthru
      _
    %p65 = scmp.eq.s32.totalorder 0, 0
    // Predicated region
    $region50: #{tpu_custom_call.1} parent=1 // pred_check
      %p66 = pneg %p65
    $region51: #{tpu_custom_call.1} parent=1 // pred_check_branch
      %68 = sbr.rel (%p66) target = $region53
    $region52: #{tpu_custom_call.1} parent=1 // pred_region
      %vm69 = vcmask 254976
      %70 = vst.msk [vmem:[#allocation2] sm:$0x3] %vm69, 0.0
      %vm71 = vcmask 1024
      %72 = vst.msk [vmem:[#allocation3] sm:$0x3] %vm71, 0.0
    $region53: #{tpu_custom_call.1} parent=1 // pred_fallthru
      _
    %v73 = vld [vmem:[%s0] sm:$0xf]
    %v74 = vld [vmem:[%s0 + $0x4] sm:$0xf]
    %v75 = vunpack.c.l.bf16 %v73
    %v76 = vunpack.c.l.bf16 %v74
    %v77 = vld [vmem:[%s1] sm:$0xf]
    %v78 = vld [vmem:[%s1 + $0x4] sm:$0xf]
    %v79 = vunpack.c.l.bf16 %v77
    %v80 = vunpack.c.l.bf16 %v78
    %v81 = vld [vmem:[#allocation2] sm:$0x3]
    %83 = vset.pattern.permute.xlu0 0
    %84 = vperm.xlu0 %83, %v79
    %v85 = vpop.permute.xlu0 %84
    %88 = vset.pattern.permute.xlu0 0
    %89 = vperm.xlu0 %88, %v80
    %v90 = vpop.permute.xlu0 %89
    %v92 = vmul.f32 %v75, %v85
    %v93 = vmul.f32 %v76, %v90
    %vm94 = vcmask 261120
    %v95 = vsel %vm94, %v92, 0.0
    %v96 = vrot.slane %v95, 4
    %v97 = vadd.f32 %v95, %v96
    %v98 = vrot.slane %v97, 2
    %v99 = vadd.f32 %v97, %v98
    %v100 = vrot.slane %v99, 1
    %v101 = vadd.f32 %v99, %v100
    %v102 = vsel %vm94, %v93, 0.0
    %v103 = vrot.slane %v102, 4
    %v104 = vadd.f32 %v102, %v103
    %v105 = vrot.slane %v104, 2
    %v106 = vadd.f32 %v104, %v105
    %v107 = vrot.slane %v106, 1
    %v108 = vadd.f32 %v106, %v107
    %vm111 = vcmask 1041409
    %v112 = vsel %vm111, %v108, %v101
    %v114 = vadd.f32 %v81, %v112
    %vm115 = vcmask 254976
    %116 = vst.msk [vmem:[#allocation2] sm:$0x3] %vm115, %v114
    %v117 = vld [vmem:[#allocation3] sm:$0x3]
    %vm118 = vcmask 7168
    %v119 = vsel %vm118, %v79, 0.0
    %v120 = vrot.slane %v119, 4
    %v121 = vadd.f32 %v119, %v120
    %v122 = vrot.slane %v121, 2
    %v123 = vadd.f32 %v121, %v122
    %v124 = vrot.slane %v123, 1
    %v125 = vadd.f32 %v123, %v124
    %v126 = vsel %vm118, %v80, 0.0
    %v127 = vrot.slane %v126, 4
    %v128 = vadd.f32 %v126, %v127
    %v129 = vrot.slane %v128, 2
    %v130 = vadd.f32 %v128, %v129
    %v131 = vrot.slane %v130, 1
    %v132 = vadd.f32 %v130, %v131
    %v135 = vsel %vm111, %v132, %v125
    %v137 = vadd.f32 %v117, %v135
    %vm138 = vcmask 1024
    %139 = vst.msk [vmem:[#allocation3] sm:$0x3] %vm138, %v137
    // Predicated region
    $region54: #{tpu_custom_call.1} parent=1 // pred_check
      %p140 = pneg %p65
    $region55: #{tpu_custom_call.1} parent=1 // pred_check_branch
      %142 = sbr.rel (%p140) target = $region57
    $region56: #{tpu_custom_call.1} parent=1 // pred_region
      %v143 = vld [vmem:[#allocation3] sm:$0x3]
      %v144 = vmax.f32 %v143, 1e-09
      %v145 = vld [vmem:[#allocation2] sm:$0x3]
      %v146 = vrcp.pop %v144
      %148 = vset.pattern.permute.xlu0 0
      %149 = vperm.xlu0 %148, %v146
      %v150 = vpop.permute.xlu0 %149
      %v152 = vmul.f32 %v145, %v150
      %v153 = vld [vmem:[#allocation5] sm:$0xff]
      %v154 = vld [vmem:[#allocation5 + $0x8] sm:$0xff]
      %v155 = vld [vmem:[#allocation5 + $0x10] sm:$0xff]
      %v156 = vld [vmem:[#allocation5 + $0x18] sm:$0xff]
      %v157 = vld [vmem:[%s3] sm:$0x1]
      %v159 = vlaneseq
      %v160 = vshrl.u32 %v159, 7
      %v161 = vsub.s32 0, %v160
      %v162 = vrot.slane %v157, %v161
      %v165 = vsel %vm94, %v152, 0
      %167 = vmatprep.subr.mxu0 0.0
      %168 = vmatpush1.msra.mxu0 0.0
      %169 = vmatprep.subr.mxu0 0.0
      %170 = vmatpush1.msra.mxu0 0.0
      %171 = vmatprep.subr.mxu0 0.0
      %172 = vmatpush1.msra.mxu0 0.0
      %173 = vmatprep.subr.mxu0 0.0
      %174 = vmatpush1.msra.mxu0 0.0
      %175 = vmatprep.subr.mxu0 0.0
      %176 = vmatpush1.msra.mxu0 0.0
      %177 = vmatprep.subr.mxu0 0.0
      %178 = vmatpush1.msra.mxu0 0.0
      %179 = vmatprep.subr.mxu0 0.0
      %180 = vmatpush1.msra.mxu0 0.0
      %181 = vmatprep.subr.mxu0 0.0
      %182 = vmatpush1.msra.mxu0 0.0
      %183 = vmatprep.subr.mxu0 0.0
      %184 = vmatpush1.msra.mxu0 0.0
      %185 = vmatprep.subr.mxu0 0.0
      %186 = vmatpush1.msra.mxu0 0.0
      %187 = vmatprep.subr.mxu0 0.0
      %188 = vmatpush1.msra.mxu0 0.0
      %189 = vmatprep.subr.mxu0 0.0
      %190 = vmatpush1.msra.mxu0 0.0
      %191 = vmatprep.subr.mxu0 0.0
      %192 = vmatpush1.msra.mxu0 %v156
      %193 = vmatprep.subr.mxu0 0.0
      %194 = vmatpush1.msra.mxu0 %v155
      %195 = vmatprep.subr.mxu0 0.0
      %196 = vmatpush1.msra.mxu0 %v154
      %197 = vmatprep.subr.mxu0 0.0
      %198 = vmatpush1.msra.mxu0 %v153
      %199 = vmatprep.subr.mxu0 0.0
      %200 = vmatpush2.msra.mxu0 0.0
      %201 = vmatprep.subr.mxu0 0.0
      %202 = vmatpush2.msra.mxu0 0.0
      %203 = vmatprep.subr.mxu0 0.0
      %204 = vmatpush2.msra.mxu0 0.0
      %205 = vmatprep.subr.mxu0 0.0
      %206 = vmatpush2.msra.mxu0 0.0
      %207 = vmatprep.subr.mxu0 0.0
      %208 = vmatpush2.msra.mxu0 0.0
      %209 = vmatprep.subr.mxu0 0.0
      %210 = vmatpush2.msra.mxu0 0.0
      %211 = vmatprep.subr.mxu0 0.0
      %212 = vmatpush2.msra.mxu0 0.0
      %213 = vmatprep.subr.mxu0 0.0
      %214 = vmatpush2.msra.mxu0 0.0
      %215 = vmatprep.subr.mxu0 0.0
      %216 = vmatpush2.msra.mxu0 0.0
      %217 = vmatprep.subr.mxu0 0.0
      %218 = vmatpush2.msra.mxu0 0.0
      %219 = vmatprep.subr.mxu0 0.0
      %220 = vmatpush2.msra.mxu0 0.0
      %221 = vmatprep.subr.mxu0 0.0
      %222 = vmatpush2.msra.mxu0 0.0
      %223 = vmatprep.subr.mxu0 0.0
      %224 = vmatpush2.msra.mxu0 0.0
      %225 = vmatprep.subr.mxu0 0.0
      %226 = vmatpush2.msra.mxu0 0.0
      %227 = vmatprep.subr.mxu0 0.0
      %228 = vmatpush2.msra.mxu0 0.0
      %229 = vmatprep.subr.mxu0 0.0
      %230 = vmatpush2.msra.mxu0 0.0
      %231 = vmatprep.mubr.f32.mxu0 0.0
      %232 = vmatmul.mubr.f32.gmra.mxu0 %v165
      %v233 = vpop.f32.mrf.mxu0
      %v234 = vadd.f32 %v162, %v233
      %v235 = vpop.f32.mrf.mxu0
      %236 = vdwg.mxu0
      %v237 = vld [vmem:[#allocation7] sm:$0xff]
      %v238 = vld [vmem:[#allocation7 + $0x8] sm:$0xff]
      %v239 = vld [vmem:[#allocation7 + $0x10] sm:$0xff]
      %v240 = vld [vmem:[#allocation7 + $0x18] sm:$0xff]
      %v241 = vld [vmem:[#allocation7 + $0x20] sm:$0xff]
      %v242 = vld [vmem:[#allocation7 + $0x28] sm:$0xff]
      %v243 = vld [vmem:[#allocation7 + $0x30] sm:$0xff]
      %v244 = vld [vmem:[#allocation7 + $0x38] sm:$0xff]
      %v245 = vld [vmem:[#allocation7 + $0x40] sm:$0xff]
      %v246 = vld [vmem:[#allocation7 + $0x48] sm:$0xff]
      %v247 = vld [vmem:[#allocation7 + $0x50] sm:$0xff]
      %v248 = vld [vmem:[#allocation7 + $0x58] sm:$0xff]
      %v249 = vld [vmem:[#allocation7 + $0x60] sm:$0xff]
      %v250 = vld [vmem:[#allocation7 + $0x68] sm:$0xff]
      %v251 = vld [vmem:[#allocation7 + $0x70] sm:$0xff]
      %v252 = vld [vmem:[#allocation7 + $0x78] sm:$0xff]
      %v253 = vld [vmem:[%s5] sm:$0x1]
      %v255 = vlaneseq
      %v256 = vshrl.u32 %v255, 7
      %v257 = vsub.s32 0, %v256
      %v258 = vrot.slane %v253, %v257
      %260 = vmatprep.subr.mxu0 0.0
      %261 = vmatpush1.msra.mxu0 %v252
      %262 = vmatprep.subr.mxu0 0.0
      %263 = vmatpush1.msra.mxu0 %v251
      %264 = vmatprep.subr.mxu0 0.0
      %265 = vmatpush1.msra.mxu0 %v250
      %266 = vmatprep.subr.mxu0 0.0
      %267 = vmatpush1.msra.mxu0 %v249
      %268 = vmatprep.subr.mxu0 0.0
      %269 = vmatpush1.msra.mxu0 %v248
      %270 = vmatprep.subr.mxu0 0.0
      %271 = vmatpush1.msra.mxu0 %v247
      %272 = vmatprep.subr.mxu0 0.0
      %273 = vmatpush1.msra.mxu0 %v246
      %274 = vmatprep.subr.mxu0 0.0
      %275 = vmatpush1.msra.mxu0 %v245
      %276 = vmatprep.subr.mxu0 0.0
      %277 = vmatpush1.msra.mxu0 %v244
      %278 = vmatprep.subr.mxu0 0.0
      %279 = vmatpush1.msra.mxu0 %v243
      %280 = vmatprep.subr.mxu0 0.0
      %281 = vmatpush1.msra.mxu0 %v242
      %282 = vmatprep.subr.mxu0 0.0
      %283 = vmatpush1.msra.mxu0 %v241
      %284 = vmatprep.subr.mxu0 0.0
      %285 = vmatpush1.msra.mxu0 %v240
      %286 = vmatprep.subr.mxu0 0.0
      %287 = vmatpush1.msra.mxu0 %v239
      %288 = vmatprep.subr.mxu0 0.0
      %289 = vmatpush1.msra.mxu0 %v238
      %290 = vmatprep.subr.mxu0 0.0
      %291 = vmatpush1.msra.mxu0 %v237
      %292 = vmatprep.subr.mxu0 0.0
      %293 = vmatpush2.msra.mxu0 0.0
      %294 = vmatprep.subr.mxu0 0.0
      %295 = vmatpush2.msra.mxu0 0.0
      %296 = vmatprep.subr.mxu0 0.0
      %297 = vmatpush2.msra.mxu0 0.0
      %298 = vmatprep.subr.mxu0 0.0
      %299 = vmatpush2.msra.mxu0 0.0
      %300 = vmatprep.subr.mxu0 0.0
      %301 = vmatpush2.msra.mxu0 0.0
      %302 = vmatprep.subr.mxu0 0.0
      %303 = vmatpush2.msra.mxu0 0.0
      %304 = vmatprep.subr.mxu0 0.0
      %305 = vmatpush2.msra.mxu0 0.0
      %306 = vmatprep.subr.mxu0 0.0
      %307 = vmatpush2.msra.mxu0 0.0
      %308 = vmatprep.subr.mxu0 0.0
      %309 = vmatpush2.msra.mxu0 0.0
      %310 = vmatprep.subr.mxu0 0.0
      %311 = vmatpush2.msra.mxu0 0.0
      %312 = vmatprep.subr.mxu0 0.0
      %313 = vmatpush2.msra.mxu0 0.0
      %314 = vmatprep.subr.mxu0 0.0
      %315 = vmatpush2.msra.mxu0 0.0
      %316 = vmatprep.subr.mxu0 0.0
      %317 = vmatpush2.msra.mxu0 0.0
      %318 = vmatprep.subr.mxu0 0.0
      %319 = vmatpush2.msra.mxu0 0.0
      %320 = vmatprep.subr.mxu0 0.0
      %321 = vmatpush2.msra.mxu0 0.0
      %322 = vmatprep.subr.mxu0 0.0
      %323 = vmatpush2.msra.mxu0 0.0
      %324 = vmatprep.mubr.f32.mxu0 0.0
      %325 = vmatmul.mubr.f32.gmra.mxu0 %v234
      %v326 = vpop.f32.mrf.mxu0
      %v327 = vadd.f32 %v258, %v326
      %v328 = vpop.f32.mrf.mxu0
      %329 = vdwg.mxu0
      %vm330 = vcmask 1041408
      %v331 = vsel %vm330, %v327, 0.0
      %332 = vadd.xlane.f32.xlu0 %v331
      %v333 = vpop.xlane.xlu0 %332
      %v334 = vrcp.pop 128.0
      %v335 = vmul.f32 %v333, %v334
      %v336 = vsub.f32 %v327, %v335
      %v337 = vmul.f32 %v336, %v336
      %v338 = vsel %vm330, %v337, 0.0
      %339 = vadd.xlane.f32.xlu0 %v338
      %v340 = vpop.xlane.xlu0 %339
      %v341 = vmul.f32 %v340, %v334
      %v342 = vadd.f32 %v341, 1e-05
      %v343 = vrsqrt.pop %v342
      %v344 = vmul.f32 %v336, %v343
      %v345 = vld [vmem:[%s6] sm:$0x1]
      %v347 = vlaneseq
      %v348 = vshrl.u32 %v347, 7
      %v349 = vsub.s32 0, %v348
      %v350 = vrot.slane %v345, %v349
      %v352 = vmul.f32 %v344, %v350
      %v353 = vld [vmem:[%s7] sm:$0x1]
      %v355 = vlaneseq
      %v356 = vshrl.u32 %v355, 7
      %v357 = vsub.s32 0, %v356
      %v358 = vrot.slane %v353, %v357
      %v360 = vadd.f32 %v352, %v358
      %v361 = vmax.f32 %v360, 0.0
      %v362 = vld [vmem:[%s8] sm:$0x1]
      %v364 = vlaneseq
      %v365 = vshrl.u32 %v364, 7
      %v366 = vsub.s32 0, %v365
      %v367 = vrot.slane %v362, %v366
      %v369 = vmul.f32 %v361, %v367
      %v370 = vsel %vm330, %v369, 0.0
      %371 = vadd.xlane.f32.xlu0 %v370
      %v372 = vpop.xlane.xlu0 %371
      %v373 = vld [vmem:[#allocation4] sm:$0x1]
      %v375 = vlaneseq
      %v376 = vshrl.u32 %v375, 7
      %v377 = vsub.s32 0, %v376
      %v378 = vrot.slane %v373, %v377
      %v380 = vadd.f32 %v372, %v378
      %381 = vst.msk [vmem:[%s10] sm:$0x3] %vm138, %v380
    $region57: #{tpu_custom_call.1} parent=1 // pred_fallthru
      _
    // Predicated region
    $region58: #{tpu_custom_call.1} parent=1 // pred_check
      _
    $region59: #{tpu_custom_call.1} parent=1 // pred_check_branch
      %383 = sbr.rel (0) target = $region61
    $region60: #{tpu_custom_call.1} parent=1 // pred_region
      _
    $region61: #{tpu_custom_call.1} parent=1 // pred_fallthru
      _
    // Predicated region
    $region62: #{tpu_custom_call.1} parent=1 // pred_check
      _
    $region63: #{tpu_custom_call.1} parent=1 // pred_check_branch
      %385 = sbr.rel (0) target = $region65
    $region64: #{tpu_custom_call.1} parent=1 // pred_region
      _
    $region65: #{tpu_custom_call.1} parent=1 // pred_fallthru
      _
    %386 = vsyncpa [#allocation6], 1
    %387 = vsyncpa [#allocation8], 1

</llo_original>
